<compile_context>
chip_gen: v7x
topology: tpu7x:2x2x1
jax: 0.10.0
libtpu: 0.0.40
codegen_flags: <defaults>
</compile_context>

<pallas_src>
import functools
import math

import jax
import jax.numpy as jnp
from jax.experimental import pallas as pl
from jax.experimental.pallas import tpu as pltpu


def _layer_scale_kernel(w_ref, x_ref, o_ref):
    # w_ref: (1, h_tile) block (resident per H-block), x_ref/o_ref: (row_tile, h_tile).
    # Pure VPU elementwise multiply with sublane-broadcast of the weight row.
    x = x_ref[...]
    w = w_ref[...]
    o_ref[...] = (x.astype(jnp.float32) * w.astype(jnp.float32)).astype(o_ref.dtype)


def _pick_h_tile(h_eff):
    """Largest clean divisor of h_eff in [128, 2048]; else the whole dim."""
    if h_eff <= 2048:
        return h_eff
    for cand in (2048, 1536, 1024, 512, 384, 256, 128):
        if h_eff % cand == 0:
            return cand
    return h_eff  # odd hidden size: single H block (still a full-dim block)


@jax.jit
def layer_scale(x, weight):
    """Computes weight * x.

    x:      activations with hidden dim last, e.g. [S, B, H].
    weight: [H] per-channel scale, or [1] scalar scale (hidden_size=None case).
    """
    orig_shape = x.shape
    H = orig_shape[-1]
    rows = 1
    for d in orig_shape[:-1]:
        rows *= d

    w = weight.reshape(-1)
    if w.shape[0] != H:
        # hidden_size=None scalar-weight case: broadcast to the hidden dim.
        w = jnp.broadcast_to(w.reshape(1), (H,))

    x2d = x.reshape(rows, H)

    # --- (a) lane-dense folding: make the last dim a multiple of 128 ---------
    fold = 128 // math.gcd(H, 128)
    if fold > 1 and rows % fold == 0:
        rows_eff = rows // fold
        h_eff = H * fold
        x2d = x2d.reshape(rows_eff, h_eff)
        w_eff = jnp.tile(w, fold)
    else:
        rows_eff, h_eff = rows, H
        w_eff = w
    w2d = w_eff.reshape(1, h_eff)

    # --- (c) hidden-dim tiling ------------------------------------------------
    h_tile = _pick_h_tile(h_eff)

    # --- (b) row tiling: ~2 MiB blocks, multiple of the sublane packing -------
    itemsize = jnp.dtype(x.dtype).itemsize
    sublane = {1: 32, 2: 16, 4: 8}.get(itemsize, 8)
    target_bytes = 2 * 1024 * 1024
    row_tile = target_bytes // (h_tile * itemsize)
    row_tile = max(sublane, (row_tile // sublane) * sublane)
    row_tile = min(row_tile, rows_eff)  # if smaller, block == full dim (valid)

    grid = (pl.cdiv(rows_eff, row_tile), h_eff // h_tile)

    # NOTE: pipeline_mode=pl.Buffered(3) on the x spec is a small optional win;
    # left at the default double-buffering to stay within v5e's 16 MiB scoped VMEM.
    out2d = pl.pallas_call(
        _layer_scale_kernel,
        out_shape=jax.ShapeDtypeStruct((rows_eff, h_eff), x.dtype),
        grid_spec=pltpu.PrefetchScalarGridSpec(
            num_scalar_prefetch=0,
            grid=grid,
            in_specs=[
                # weight block depends only on the H axis -> not re-fetched per row tile
                pl.BlockSpec((1, h_tile), lambda i, j: (0, j)),
                pl.BlockSpec((row_tile, h_tile), lambda i, j: (i, j)),
            ],
            out_specs=pl.BlockSpec((row_tile, h_tile), lambda i, j: (i, j)),
        ),
        compiler_params=pltpu.CompilerParams(
            dimension_semantics=("parallel", "parallel"),
        ),
    )(w2d, x2d)

    return out2d.reshape(orig_shape)


if __name__ == "__main__":
    # Deterministic parameter init (mirrors nn.init.constant_(weight, initial_value)).
    hidden_size = 32
    initial_value = 0.1
    weight = jnp.full((hidden_size,), initial_value, dtype=jnp.float32)

    # Small example input: seq=8, batch=2, hidden=32 ([S, B, H] Megatron layout).
    key = jax.random.PRNGKey(0)
    x = jax.random.normal(key, (8, 2, hidden_size), dtype=jnp.float32)

    out = jax.block_until_ready(layer_scale(x, weight))

    # Reference check (pure JAX broadcast multiply).
    ref = weight * x
    assert out.shape == x.shape
    assert out.dtype == x.dtype
    assert jnp.allclose(out, ref, atol=1e-6, rtol=1e-6)

    # Also exercise the hidden_size=None (scalar weight) path.
    scalar_weight = jnp.full((1,), initial_value, dtype=jnp.float32)
    out_scalar = jax.block_until_ready(layer_scale(x, scalar_weight))
    assert jnp.allclose(out_scalar, scalar_weight * x, atol=1e-6, rtol=1e-6)

    # And a shape that doesn't need folding (H multiple of 128) with row tiling.
    x_big = jax.random.normal(jax.random.PRNGKey(1), (64, 4, 256), dtype=jnp.float32)
    w_big = jnp.full((256,), 0.5, dtype=jnp.float32)
    out_big = jax.block_until_ready(layer_scale(x_big, w_big))
    assert jnp.allclose(out_big, w_big * x_big, atol=1e-6, rtol=1e-6)

    print("KERNEL_OK")
</pallas_src>

<mosaic_0001>
module attributes {stable_mosaic.version = 11 : i64} {
  func.func @_layer_scale_kernel(%arg0: i32, %arg1: i32, %arg2: memref<1x128xf32, #tpu.memory_space<vmem>>, %arg3: memref<4x128xf32, #tpu.memory_space<vmem>>, %arg4: memref<4x128xf32, #tpu.memory_space<vmem>>) attributes {dimension_semantics = [#tpu.dimension_semantics<parallel>, #tpu.dimension_semantics<parallel>], iteration_bounds = array<i64: 1, 1>, scalar_prefetch = 0 : i64, scratch_operands = 0 : i64, tpu.core_type = #tpu.core_type<tc>, window_params = [{transform_indices = @transform_0, window_bounds = array<i64: 1, 128>}, {transform_indices = @transform_1, window_bounds = array<i64: 4, 128>}, {transform_indices = @transform_2, window_bounds = array<i64: 4, 128>}]} {
    %c0 = arith.constant 0 : index
    %c0_0 = arith.constant 0 : index
    %0 = vector.load %arg3[%c0, %c0_0] : memref<4x128xf32, #tpu.memory_space<vmem>>, vector<4x128xf32>
    %c0_1 = arith.constant 0 : index
    %c0_2 = arith.constant 0 : index
    %1 = vector.load %arg2[%c0_1, %c0_2] : memref<1x128xf32, #tpu.memory_space<vmem>>, vector<1x128xf32>
    %2 = vector.broadcast %1 : vector<1x128xf32> to vector<4x128xf32>
    %3 = arith.mulf %0, %2 : vector<4x128xf32>
    %c0_3 = arith.constant 0 : index
    %c0_4 = arith.constant 0 : index
    %4 = vector.load %arg4[%c0_3, %c0_4] : memref<4x128xf32, #tpu.memory_space<vmem>>, vector<4x128xf32>
    tpu.vector_store %arg4[%c0_3, %c0_4], %3 {strides = array<i32>} : memref<4x128xf32, #tpu.memory_space<vmem>>, vector<4x128xf32>,
    return
  }
  func.func @transform_0(%arg0: i32, %arg1: i32) -> (i32, i32) {
    %c0_i32 = arith.constant 0 : i32
    %c0_i32_0 = arith.constant 0 : i32
    return %c0_i32, %arg1 : i32, i32
  }
  func.func @transform_1(%arg0: i32, %arg1: i32) -> (i32, i32) {
    %c0_i32 = arith.constant 0 : i32
    return %arg0, %arg1 : i32, i32
  }
  func.func @transform_2(%arg0: i32, %arg1: i32) -> (i32, i32) {
    %c0_i32 = arith.constant 0 : i32
    return %arg0, %arg1 : i32, i32
  }
}

</mosaic_0001>

<llo_original>
// kernel: tile.9
$region0: #{tile.9}
  %s0 = inlined_call_operand.vmem [shape: f32[4,32], index: 0, kind: input, shape index: {}]
  %s1 = inlined_call_operand.vmem [shape: f32[1,128], index: 1, kind: output, shape index: {}]
  $region1: #{tile.9} parent=0
    #allocation0 [shape = 'u8[4096]{0}', space=vmem, size = 0x1000, scoped, tag = 'scoped mem for output reshape']
    #allocation1 [shape = 'u8[4096]{0}', space=vmem, size = 0x1000, scoped, tag = 'scoped mem for input reshape']
    %s3 = sshllo.u32 0, 4
    %v4 = vld [vmem:[%s0] sm:%s3]
    %5 = vst [vmem:[#allocation1] sm:%s3] %v4
    %v6 = vld [vmem:[#allocation1] sm:$0x1]
    %vm7 = vcmask 261120
    %8 = vst.msk [vmem:[#allocation0] sm:$0x1] %vm7, %v6
    %s9 = scalar_lea.vmem [#allocation1], 3
    %v10 = vld [vmem:[%s9] sm:$0x1]
    %11 = vrot.lane.b32.xlu0 %v10, 96
    %v12 = vpop.permute.xlu0 %11
    %vm13 = vcmask 1048320
    %14 = vst.msk [vmem:[#allocation0] sm:$0x1] %vm13, %v12
    %s15 = scalar_lea.vmem [#allocation1], 2
    %v16 = vld [vmem:[%s15] sm:$0x1]
    %17 = vrot.lane.b32.xlu0 %v16, 64
    %v18 = vpop.permute.xlu0 %17
    %vm19 = vcmask 785920
    %20 = vst.msk [vmem:[#allocation0] sm:$0x1] %vm19, %v18
    %s21 = scalar_lea.vmem [#allocation1], 1
    %v22 = vld [vmem:[%s21] sm:$0x1]
    %23 = vrot.lane.b32.xlu0 %v22, 32
    %v24 = vpop.permute.xlu0 %23
    %vm25 = vcmask 523520
    %26 = vst.msk [vmem:[#allocation0] sm:$0x1] %vm25, %v24
    %s28 = sshllo.u32 0, 1
    %v30 = vld [vmem:[#allocation0] sm:%s28]
    %s31 = sshllo.u32 0, 1
    %32 = vst [vmem:[%s1] sm:%s31] %v30

// kernel: tile.8
$region0: #{tile.8}
  #allocation0 [shape = 's32[1]{0}', space=sflag, size = 0x4, scoped, tag = 'scoped memory for tile.8']
  %s0 = inlined_call_operand.vmem [shape: f32[32], index: 0, kind: input, shape index: {}]
  %s1 = inlined_call_operand.vmem [shape: f32[4,32], index: 1, kind: output, shape index: {}]
  // Predicated region
  $region2: #{tile.8} parent=0 // pred_check
    _
  $region3: #{tile.8} parent=0 // pred_check_branch
    %3 = sbr.rel (0) target = $region5
  $region4: #{tile.8} parent=0 // pred_region
    _
  $region5: #{tile.8} parent=0 // pred_fallthru
    _
  %v4 = vld [vmem:[%s0] ss:$0 sm:$0xff]
  %5 = vst [vmem:[%s1] sm:$0xf] %v4

// kernel: layer_scale.1
$region0: #{layer_scale.1}
  #allocation0 [shape = 'u32[]', space=smem, size = 0x4, offset = 0x4, fixed_abs, tag = 'smem constant byte address 0x4 - core index']
  #allocation1 [shape = 'u32[144,128]{1,0:T(1,128)}', space=vmem, size = 0x12000, scoped, tag = 'internal scratch']
  %s0 = inlined_call_operand.vmem [shape: f32[1,128], index: 0, kind: input, shape index: {}]
  %s1 = inlined_call_operand.vmem [shape: f32[4,128], index: 1, kind: input, shape index: {}]
  %s2 = inlined_call_operand.vmem [shape: f32[4,128], index: 2, kind: output, shape index: {}]
  %s3 = sld [smem:[#allocation0]]
  $region18: #{layer_scale.1} parent=0
    _
  %s5 = ssub.s32 1, %s3
  %s6 = scalar_select 0, %s5, %s3
  // Predicated region
  $region2: #{layer_scale.1} parent=0 // pred_check
    _
  $region3: #{layer_scale.1} parent=0 // pred_check_branch
    %8 = sbr.rel (0) target = $region5
  $region4: #{layer_scale.1} parent=0 // pred_region
    _
  $region5: #{layer_scale.1} parent=0 // pred_fallthru
    _
  // Predicated region
  $region6: #{layer_scale.1} parent=0 // pred_check
    _
  $region7: #{layer_scale.1} parent=0 // pred_check_branch
    %10 = sbr.rel (0) target = $region9
  $region8: #{layer_scale.1} parent=0 // pred_region
    _
  $region9: #{layer_scale.1} parent=0 // pred_fallthru
    _
  %v11 = vld [vmem:[%s1] sm:$0xf]
  %v12 = vld [vmem:[%s0] sm:$0x1]
  %v14 = vlaneseq
  %v15 = vshrl.u32 %v14, 7
  %v16 = vsub.s32 0, %v15
  %v17 = vrot.slane %v12, %v16
  %v19 = vmul.f32 %v11, %v17
  %20 = vst [vmem:[%s2] sm:$0xf] %v19
  // Predicated region
  $region10: #{layer_scale.1} parent=0 // pred_check
    _
  $region11: #{layer_scale.1} parent=0 // pred_check_branch
    %22 = sbr.rel (0) target = $region13
  $region12: #{layer_scale.1} parent=0 // pred_region
    _
  $region13: #{layer_scale.1} parent=0 // pred_fallthru
    _
  // Predicated region
  $region14: #{layer_scale.1} parent=0 // pred_check
    _
  $region15: #{layer_scale.1} parent=0 // pred_check_branch
    %24 = sbr.rel (0) target = $region17
  $region16: #{layer_scale.1} parent=0 // pred_region
    _
  $region17: #{layer_scale.1} parent=0 // pred_fallthru
    _

</llo_original>
